<compile_context>
chip_gen: v6e
topology: v6e:2x2x1
jax: 0.10.0
libtpu: 0.0.40
codegen_flags: <defaults>
</compile_context>

<pallas_src>
import math

import numpy as np

import jax
import jax.numpy as jnp
from jax.experimental import pallas as pl
from jax.experimental.pallas import tpu as pltpu

_MIB = 1 << 20


def _round_up(x, m):
    return ((x + m - 1) // m) * m


# ---------------------------------------------------------------------------
# Kernel 1: visual_projection  (nn.Linear(in_dim -> projection_dim, bias=False))
#   y = x @ W^T ; W is pre-transposed once in the wrapper to (K, N) bf16.
# ---------------------------------------------------------------------------
def _proj_kernel(x_ref, w_ref, o_ref):
    # x: (tm, K) f32 -> cast to bf16 here (saves a full wrapper-cast HBM pass).
    # w: (K, tn or N) bf16, already in native MXU RHS layout.
    x_bf = x_ref[...].astype(jnp.bfloat16)
    o_ref[...] = jnp.dot(
        x_bf, w_ref[...], preferred_element_type=jnp.float32
    ).astype(o_ref.dtype)


def visual_projection(x, w_torch, *, tm=512, tn=512,
                      weight_resident_bytes=8 * _MIB):
    """x: (M, K) f32 activations, w_torch: (N_out, K) torch-layout weight."""
    M, K = x.shape
    N_out, K2 = w_torch.shape
    assert K == K2, (K, K2)
    out_dtype = x.dtype
    itemsize_x = np.dtype(x.dtype).itemsize
    itemsize_o = np.dtype(out_dtype).itemsize

    # One-time transpose + cast of the weight (amortised over all row tiles).
    wc = w_torch.T.astype(jnp.bfloat16)          # (K, N_out) bf16

    tm_eff = min(tm, _round_up(M, 8))
    Mp = _round_up(M, tm_eff)
    Np = _round_up(N_out, 128)                   # lane-dense output columns
    if Mp != M:
        x = jnp.pad(x, ((0, Mp - M), (0, 0)))
    if Np != N_out:
        wc = jnp.pad(wc, ((0, 0), (0, Np - N_out)))

    w_bytes = K * Np * 2

    if w_bytes <= weight_resident_bytes:
        # Weight resident in VMEM: one HBM pass over the weight, 1-D grid over
        # row tiles, lane-dense full-N output block.
        grid = (Mp // tm_eff,)
        in_specs = [
            pl.BlockSpec((tm_eff, K), lambda i: (i, 0)),
            pl.BlockSpec((K, Np), lambda i: (0, 0)),
        ]
        out_specs = pl.BlockSpec((tm_eff, Np), lambda i: (i, 0))
        dim_sem = ("parallel",)
        vmem_est = (2 * tm_eff * K * itemsize_x + 2 * K * Np * 2
                    + 2 * tm_eff * Np * itemsize_o)
        w_hbm_bytes = K * Np * 2
    else:
        # Fallback: tile N too. Row axis innermost so the weight block index is
        # constant along the inner axis (weight streamed once per column tile).
        tn_eff = _round_up(min(tn, Np), 128)
        Np2 = _round_up(Np, tn_eff)
        if Np2 != Np:
            wc = jnp.pad(wc, ((0, 0), (0, Np2 - Np)))
            Np = Np2
        grid = (Np // tn_eff, Mp // tm_eff)
        in_specs = [
            pl.BlockSpec((tm_eff, K), lambda j, i: (i, 0)),
            pl.BlockSpec((K, tn_eff), lambda j, i: (0, j)),
        ]
        out_specs = pl.BlockSpec((tm_eff, tn_eff), lambda j, i: (i, j))
        dim_sem = ("parallel", "parallel")
        vmem_est = (2 * tm_eff * K * itemsize_x + 2 * K * tn_eff * 2
                    + 2 * tm_eff * tn_eff * itemsize_o)
        w_hbm_bytes = (Np // tn_eff) * K * tn_eff * 2 \
            + (Mp // tm_eff) * (Np // tn_eff - 1) * 0  # weight read once/col tile

    vmem_limit = int(min(max(2 * vmem_est, 32 * _MIB), 128 * _MIB))
    cost = pl.CostEstimate(
        flops=2 * Mp * K * Np, transcendentals=0,
        bytes_accessed=Mp * K * itemsize_x + w_hbm_bytes + Mp * Np * itemsize_o)

    out = pl.pallas_call(
        _proj_kernel,
        out_shape=jax.ShapeDtypeStruct((Mp, Np), out_dtype),
        grid_spec=pltpu.PrefetchScalarGridSpec(
            num_scalar_prefetch=0,
            grid=grid,
            in_specs=in_specs,
            out_specs=out_specs,
        ),
        compiler_params=pltpu.CompilerParams(
            dimension_semantics=dim_sem,
            vmem_limit_bytes=vmem_limit),
        cost_estimate=cost,
    )(x, wc)
    if (Mp, Np) != (M, N_out):
        out = out[:M, :N_out]
    return out


# ---------------------------------------------------------------------------
# Kernel 2: CLIPContrastiveLoss
#   logits = exp(logit_scale) * V @ P^T
#   loss   = 0.5 * (CE(logits, arange) + CE(logits^T, arange))
# Tiled over row blocks with an online column logsumexp, so the full (N, N)
# logits matrix never lives in VMEM at once.
# ---------------------------------------------------------------------------
def _clip_loss_kernel(scale_ref, v_ref, p_ref, loss_ref, mc_ref, sc_ref, acc_ref):
    i = pl.program_id(0)
    tr = v_ref.shape[0]
    n_total = p_ref.shape[0]
    scale = scale_ref[0]                                    # SMEM scalar

    @pl.when(i == 0)
    def _():
        mc_ref[...] = jnp.full_like(mc_ref, -jnp.inf)
        sc_ref[...] = jnp.zeros_like(sc_ref)
        acc_ref[0] = 0.0
        acc_ref[1] = 0.0
        loss_ref[0, 0] = 0.0   # insurance if the revisited block is written back

    # (tr, N) logits block on the MXU, f32 accumulation.
    logits = jax.lax.dot_general(
        v_ref[...], p_ref[...],
        dimension_numbers=(((1,), (1,)), ((), ())),
        preferred_element_type=jnp.float32) * scale

    # image -> text: exact per-row logsumexp (the whole row is in this block).
    m_r = jnp.max(logits, axis=1, keepdims=True)
    lse_r = m_r + jnp.log(jnp.sum(jnp.exp(logits - m_r), axis=1, keepdims=True))

    # Diagonal (target) logits of this row block, recomputed from a (tr, d)
    # ref-slice of P (cheap VPU mult+reduce) instead of a (tr, N) iota/select.
    col0 = pl.multiple_of(i * tr, tr)
    p_diag = p_ref[pl.ds(col0, tr), :].astype(jnp.float32)
    diag_sum = jnp.sum(v_ref[...].astype(jnp.float32) * p_diag) * scale

    acc_ref[0] = acc_ref[0] + jnp.sum(lse_r)
    acc_ref[1] = acc_ref[1] + diag_sum

    # text -> image: online (flash-style) column logsumexp accumulation.
    # (exp-dedup via exp(m_r - new_m) intentionally avoided: unbounded logits.)
    blk_max = jnp.max(logits, axis=0, keepdims=True)        # (1, N)
    new_m = jnp.maximum(mc_ref[...], blk_max)
    sc_ref[...] = (sc_ref[...] * jnp.exp(mc_ref[...] - new_m)
                   + jnp.sum(jnp.exp(logits - new_m), axis=0, keepdims=True))
    mc_ref[...] = new_m

    @pl.when(i == pl.num_programs(0) - 1)
    def _():
        col_lse_sum = jnp.sum(jnp.log(sc_ref[...]) + mc_ref[...])
        n_f = jnp.float32(n_total)
        loss_i2t = (acc_ref[0] - acc_ref[1]) / n_f
        loss_t2i = (col_lse_sum - acc_ref[1]) / n_f
        loss_ref[0, 0] = 0.5 * (loss_i2t + loss_t2i)


def _pick_row_block(n):
    for tr in (256, 128, 64, 32, 16, 8):
        if n % tr == 0:
            return tr
    return n  # fall back to a single block


def clip_contrastive_loss(vision_latent, problem_latent, logit_scale,
                          *, compute_dtype=jnp.bfloat16):
    n, d = vision_latent.shape
    assert problem_latent.shape == (n, d)
    tr = _pick_row_block(n)
    num_blocks = n // tr

    scale = jnp.exp(logit_scale).astype(jnp.float32).reshape(1)   # (1,) SMEM
    v = vision_latent.astype(compute_dtype)
    p = problem_latent.astype(compute_dtype)

    # VMEM sizing: resident P (double-buffered), V row block, logits transients,
    # scratch accumulators — with headroom.
    vmem_est = (2 * n * d * 2 + 2 * tr * d * 2 + 3 * tr * n * 4 + 2 * n * 4)
    vmem_limit = int(min(max(2 * vmem_est, 32 * _MIB), 128 * _MIB))

    loss = pl.pallas_call(
        _clip_loss_kernel,
        out_shape=jax.ShapeDtypeStruct((1, 1), jnp.float32),
        grid_spec=pltpu.PrefetchScalarGridSpec(
            num_scalar_prefetch=0,
            grid=(num_blocks,),
            in_specs=[
                pl.BlockSpec(memory_space=pltpu.MemorySpace.SMEM),  # exp(scale)
                pl.BlockSpec((tr, d), lambda i: (i, 0)),            # V row block
                pl.BlockSpec((n, d), lambda i: (0, 0)),              # full P (resident)
            ],
            out_specs=pl.BlockSpec((1, 1), lambda i: (0, 0)),
            scratch_shapes=[
                pltpu.VMEM((1, n), jnp.float32),   # running column max
                pltpu.VMEM((1, n), jnp.float32),   # running column exp-sum
                pltpu.SMEM((2,), jnp.float32),     # [sum(row lse), sum(diag)]
            ],
        ),
        compiler_params=pltpu.CompilerParams(
            dimension_semantics=("arbitrary",),
            vmem_limit_bytes=vmem_limit),
    )(scale, v, p)
    return loss[0, 0]


# ---------------------------------------------------------------------------
# LatentPhysx.forward equivalent
# ---------------------------------------------------------------------------
def latent_physx_forward(pooler_output, problem_latent, w_proj, logit_scale,
                         compute_loss=False):
    vision_latent = visual_projection(pooler_output, w_proj)
    out = {"vision_latent": vision_latent, "problem_latent": problem_latent}
    if compute_loss:
        loss = clip_contrastive_loss(vision_latent, problem_latent, logit_scale)
        return out, {"loss": loss}
    return out


if __name__ == "__main__":
    # Small shapes consistent with the module: N rows of embeddings, a bias-free
    # Linear from the pooler dim to the projection dim, and the contrastive loss.
    N, IN_DIM, PROJ_DIM = 16, 256, 256

    key = jax.random.PRNGKey(0)
    k1, k2, k3 = jax.random.split(key, 3)
    pooler_output = jax.random.normal(k1, (N, IN_DIM), jnp.float32)      # vision pooler_output
    problem_latent = jax.random.normal(k2, (N, PROJ_DIM), jnp.float32)   # ProblemEncoder output
    # Deterministic parameter init (torch layout: (out_features, in_features))
    w_proj = jax.random.normal(k3, (PROJ_DIM, IN_DIM), jnp.float32) / math.sqrt(IN_DIM)
    logit_scale = jnp.float32(math.log(1.0 / 0.07))                      # nn.Parameter init

    out, loss_dict = latent_physx_forward(pooler_output, problem_latent,
                                          w_proj, logit_scale, compute_loss=True)
    vision_latent = jax.block_until_ready(out["vision_latent"])
    loss = jax.block_until_ready(loss_dict["loss"])

    # Pure-JAX reference with matching bf16 input quantization.
    x_bf = pooler_output.astype(jnp.bfloat16).astype(jnp.float32)
    w_bf = w_proj.astype(jnp.bfloat16).astype(jnp.float32)
    vl_ref = x_bf @ w_bf.T

    v_bf = vision_latent.astype(jnp.bfloat16).astype(jnp.float32)
    p_bf = problem_latent.astype(jnp.bfloat16).astype(jnp.float32)
    logits_ref = jnp.exp(logit_scale) * (v_bf @ p_bf.T)
    diag = jnp.diagonal(logits_ref)
    loss_ref = 0.5 * (jnp.mean(jax.nn.logsumexp(logits_ref, axis=1) - diag)
                      + jnp.mean(jax.nn.logsumexp(logits_ref, axis=0) - diag))

    assert jnp.allclose(vision_latent, vl_ref, atol=5e-3, rtol=5e-3), \
        float(jnp.max(jnp.abs(vision_latent - vl_ref)))
    assert jnp.allclose(loss, loss_ref, atol=0.5, rtol=5e-3), (float(loss), float(loss_ref))

    print("KERNEL_OK")
</pallas_src>

<mosaic_0001>
module attributes {stable_mosaic.version = 11 : i64} {
  func.func @_proj_kernel(%arg0: i32, %arg1: memref<16x256xf32, #tpu.memory_space<vmem>>, %arg2: memref<256x256xbf16, #tpu.memory_space<vmem>>, %arg3: memref<16x256xf32, #tpu.memory_space<vmem>>) attributes {dimension_semantics = [#tpu.dimension_semantics<parallel>], iteration_bounds = array<i64: 1>, scalar_prefetch = 0 : i64, scratch_operands = 0 : i64, tpu.core_type = #tpu.core_type<tc>, window_params = [{transform_indices = @transform_0, window_bounds = array<i64: 16, 256>}, {pipeline_mode = #tpu.pipeline_mode<synchronous>, transform_indices = @transform_1, window_bounds = array<i64: 256, 256>}, {transform_indices = @transform_2, window_bounds = array<i64: 16, 256>}]} {
    %c0 = arith.constant 0 : index
    %c0_0 = arith.constant 0 : index
    %0 = vector.load %arg1[%c0, %c0_0] : memref<16x256xf32, #tpu.memory_space<vmem>>, vector<16x256xf32>
    %1 = arith.truncf %0 : vector<16x256xf32> to vector<16x256xbf16>
    %c0_1 = arith.constant 0 : index
    %c0_2 = arith.constant 0 : index
    %2 = vector.load %arg2[%c0_1, %c0_2] : memref<256x256xbf16, #tpu.memory_space<vmem>>, vector<256x256xbf16>
    %cst = arith.constant dense<0.000000e+00> : vector<16x256xf32>
    %3 = tpu.matmul %1, %2, %cst {dimension_numbers = #tpu.dot_dimension_numbers<[1], [0], [0], [1], [0, 0, 1, 1], [], []>} : vector<16x256xbf16>, vector<256x256xbf16>, vector<16x256xf32> -> vector<16x256xf32>
    %c0_3 = arith.constant 0 : index
    %c0_4 = arith.constant 0 : index
    %4 = vector.load %arg3[%c0_3, %c0_4] : memref<16x256xf32, #tpu.memory_space<vmem>>, vector<16x256xf32>
    tpu.vector_store %arg3[%c0_3, %c0_4], %3 {strides = array<i32>} : memref<16x256xf32, #tpu.memory_space<vmem>>, vector<16x256xf32>,
    return
  }
  func.func @transform_0(%arg0: i32) -> (i32, i32) {
    %c0_i32 = arith.constant 0 : i32
    %c0_i32_0 = arith.constant 0 : i32
    return %arg0, %c0_i32 : i32, i32
  }
  func.func @transform_1(%arg0: i32) -> (i32, i32) {
    %c0_i32 = arith.constant 0 : i32
    %c0_i32_0 = arith.constant 0 : i32
    %c0_i32_1 = arith.constant 0 : i32
    return %c0_i32, %c0_i32_0 : i32, i32
  }
  func.func @transform_2(%arg0: i32) -> (i32, i32) {
    %c0_i32 = arith.constant 0 : i32
    %c0_i32_0 = arith.constant 0 : i32
    return %arg0, %c0_i32 : i32, i32
  }
}

</mosaic_0001>

<llo_original>
// kernel: tpu_custom_call.1
$region0: #{tpu_custom_call.1}
  #allocation0 [shape = 'u32[]', space=smem, size = 0x4, offset = 0x4, fixed_abs, tag = 'smem constant byte address 0x4 - core index']
  #allocation1 [shape = 'u32[144,128]{1,0:T(1,128)}', space=vmem, size = 0x12000, scoped, tag = 'internal scratch']
  %s0 = inlined_call_operand.hbm [shape: f32[16,256], index: 0, kind: input, shape index: {}]
  %s1 = inlined_call_operand.hbm [shape: bf16[256,256], index: 1, kind: input, shape index: {}]
  %s2 = inlined_call_operand.hbm [shape: f32[16,256], index: 2, kind: output, shape index: {}]
  %s3 = sld [smem:[#allocation0]]
  $region26: #{tpu_custom_call.1} parent=0
    _
  %s5 = ssub.s32 1, %s3
  %s6 = scalar_select 0, %s5, %s3
  $region1: #{tpu_custom_call.1} parent=0
    #allocation2 [shape = 'u8[16384]{0}', space=vmem, size = 0x4000, scoped, tag = 'input window, operand 0, single buffered']
    #allocation3 [shape = 's32[1]{0}', space=sflag, size = 0x4, scoped, tag = 'scoped memory for tpu_custom_call.1']
    #allocation4 [shape = 's32[1]{0}', space=sflag, size = 0x4, scoped, tag = 'scoped memory for tpu_custom_call.1']
    #allocation5 [shape = 'u8[131072]{0}', space=vmem, size = 0x20000, scoped, tag = 'input window, operand 1, single buffered']
    #allocation6 [shape = 's32[1]{0}', space=sflag, size = 0x4, scoped, tag = 'scoped memory for tpu_custom_call.1']
    #allocation7 [shape = 'u8[16384]{0}', space=vmem, size = 0x4000, scoped, tag = 'output window, operand 0, single buffered']
    %7 = vsyncpa [#allocation3], 0
    %8 = vsyncpa [#allocation6], 0
    %9 = vsyncpa [#allocation4], 0
    // Predicated region
    $region2: #{tpu_custom_call.1} parent=1 // pred_check
      _
    $region3: #{tpu_custom_call.1} parent=1 // pred_check_branch
      %11 = sbr.rel (0) target = $region5
    $region4: #{tpu_custom_call.1} parent=1 // pred_region
      %s13 = ssub.s32 512, 512
      %14 = vsyncadd [#allocation3], %s13
      %s15 = sshll.u32 [#allocation2], 4
      %s16 = int_to_ptr.vmem [resolvable:$true] %s15
      %21 = dma.hbm_to_vmem [thread:$0]  %s0, 512, %s16, [#allocation3], 256, 256, 16
    $region5: #{tpu_custom_call.1} parent=1 // pred_fallthru
      _
    // Predicated region
    $region6: #{tpu_custom_call.1} parent=1 // pred_check
      _
    $region7: #{tpu_custom_call.1} parent=1 // pred_check_branch
      %23 = sbr.rel (0) target = $region9
    $region8: #{tpu_custom_call.1} parent=1 // pred_region
      %s25 = ssub.s32 4096, 4096
      %26 = vsyncadd [#allocation6], %s25
      %s27 = sshll.u32 [#allocation5], 4
      %s28 = int_to_ptr.vmem [resolvable:$true] %s27
      %33 = dma.hbm_to_vmem [thread:$0]  %s1, 4096, %s28, [#allocation6], 128, 128, 8
    $region9: #{tpu_custom_call.1} parent=1 // pred_fallthru
      _
    // Predicated region
    $region10: #{tpu_custom_call.1} parent=1 // pred_check
      _
    $region11: #{tpu_custom_call.1} parent=1 // pred_check_branch
      %35 = sbr.rel (0) target = $region13
    $region12: #{tpu_custom_call.1} parent=1 // pred_region
      %36 = dma.done [#allocation3], 512
    $region13: #{tpu_custom_call.1} parent=1 // pred_fallthru
      _
    // Predicated region
    $region14: #{tpu_custom_call.1} parent=1 // pred_check
      _
    $region15: #{tpu_custom_call.1} parent=1 // pred_check_branch
      %38 = sbr.rel (0) target = $region17
    $region16: #{tpu_custom_call.1} parent=1 // pred_region
      %39 = dma.done [#allocation6], 4096
    $region17: #{tpu_custom_call.1} parent=1 // pred_fallthru
      _
    %v40 = vld [vmem:[#allocation2] sm:$0xff]
    %v41 = vld [vmem:[#allocation2 + $0x8] sm:$0xff]
    %v42 = vld [vmem:[#allocation2 + $0x10] sm:$0xff]
    %v43 = vld [vmem:[#allocation2 + $0x18] sm:$0xff]
    %v44 = vpack.c.bf16 %v42, %v40
    %v45 = vpack.c.bf16 %v43, %v41
    %v46 = vld [vmem:[#allocation5] sm:$0xff]
    %v47 = vld [vmem:[#allocation5 + $0x8] sm:$0xff]
    %v48 = vld [vmem:[#allocation5 + $0x10] sm:$0xff]
    %v49 = vld [vmem:[#allocation5 + $0x18] sm:$0xff]
    %v50 = vld [vmem:[#allocation5 + $0x20] sm:$0xff]
    %v51 = vld [vmem:[#allocation5 + $0x28] sm:$0xff]
    %v52 = vld [vmem:[#allocation5 + $0x30] sm:$0xff]
    %v53 = vld [vmem:[#allocation5 + $0x38] sm:$0xff]
    %v54 = vld [vmem:[#allocation5 + $0x40] sm:$0xff]
    %v55 = vld [vmem:[#allocation5 + $0x48] sm:$0xff]
    %v56 = vld [vmem:[#allocation5 + $0x50] sm:$0xff]
    %v57 = vld [vmem:[#allocation5 + $0x58] sm:$0xff]
    %v58 = vld [vmem:[#allocation5 + $0x60] sm:$0xff]
    %v59 = vld [vmem:[#allocation5 + $0x68] sm:$0xff]
    %v60 = vld [vmem:[#allocation5 + $0x70] sm:$0xff]
    %v61 = vld [vmem:[#allocation5 + $0x78] sm:$0xff]
    %v62 = vld [vmem:[#allocation5 + $0x80] sm:$0xff]
    %v63 = vld [vmem:[#allocation5 + $0x88] sm:$0xff]
    %v64 = vld [vmem:[#allocation5 + $0x90] sm:$0xff]
    %v65 = vld [vmem:[#allocation5 + $0x98] sm:$0xff]
    %v66 = vld [vmem:[#allocation5 + $0xa0] sm:$0xff]
    %v67 = vld [vmem:[#allocation5 + $0xa8] sm:$0xff]
    %v68 = vld [vmem:[#allocation5 + $0xb0] sm:$0xff]
    %v69 = vld [vmem:[#allocation5 + $0xb8] sm:$0xff]
    %v70 = vld [vmem:[#allocation5 + $0xc0] sm:$0xff]
    %v71 = vld [vmem:[#allocation5 + $0xc8] sm:$0xff]
    %v72 = vld [vmem:[#allocation5 + $0xd0] sm:$0xff]
    %v73 = vld [vmem:[#allocation5 + $0xd8] sm:$0xff]
    %v74 = vld [vmem:[#allocation5 + $0xe0] sm:$0xff]
    %v75 = vld [vmem:[#allocation5 + $0xe8] sm:$0xff]
    %v76 = vld [vmem:[#allocation5 + $0xf0] sm:$0xff]
    %v77 = vld [vmem:[#allocation5 + $0xf8] sm:$0xff]
    %v110 = vunpack.c.l.b16 %v46
    %v111 = vunpack.c.h.b16 %v46
    %v112 = vunpack.c.l.b16 %v47
    %v113 = vunpack.c.h.b16 %v47
    %v114 = vunpack.c.l.b16 %v48
    %v115 = vunpack.c.h.b16 %v48
    %v116 = vunpack.c.l.b16 %v49
    %v117 = vunpack.c.h.b16 %v49
    %v118 = vunpack.c.l.b16 %v50
    %v119 = vunpack.c.h.b16 %v50
    %v120 = vunpack.c.l.b16 %v51
    %v121 = vunpack.c.h.b16 %v51
    %v122 = vunpack.c.l.b16 %v52
    %v123 = vunpack.c.h.b16 %v52
    %v124 = vunpack.c.l.b16 %v53
    %v125 = vunpack.c.h.b16 %v53
    %v126 = vunpack.c.l.b16 %v54
    %v127 = vunpack.c.h.b16 %v54
    %v128 = vunpack.c.l.b16 %v55
    %v129 = vunpack.c.h.b16 %v55
    %v130 = vunpack.c.l.b16 %v56
    %v131 = vunpack.c.h.b16 %v56
    %v132 = vunpack.c.l.b16 %v57
    %v133 = vunpack.c.h.b16 %v57
    %v134 = vunpack.c.l.b16 %v58
    %v135 = vunpack.c.h.b16 %v58
    %v136 = vunpack.c.l.b16 %v59
    %v137 = vunpack.c.h.b16 %v59
    %v138 = vunpack.c.l.b16 %v60
    %v139 = vunpack.c.h.b16 %v60
    %v140 = vunpack.c.l.b16 %v61
    %v141 = vunpack.c.h.b16 %v61
    %v142 = vunpack.c.l.b16 %v62
    %v143 = vunpack.c.h.b16 %v62
    %v144 = vunpack.c.l.b16 %v63
    %v145 = vunpack.c.h.b16 %v63
    %v146 = vunpack.c.l.b16 %v64
    %v147 = vunpack.c.h.b16 %v64
    %v148 = vunpack.c.l.b16 %v65
    %v149 = vunpack.c.h.b16 %v65
    %v150 = vunpack.c.l.b16 %v66
    %v151 = vunpack.c.h.b16 %v66
    %v152 = vunpack.c.l.b16 %v67
    %v153 = vunpack.c.h.b16 %v67
    %v154 = vunpack.c.l.b16 %v68
    %v155 = vunpack.c.h.b16 %v68
    %v156 = vunpack.c.l.b16 %v69
    %v157 = vunpack.c.h.b16 %v69
    %v158 = vunpack.c.l.b16 %v70
    %v159 = vunpack.c.h.b16 %v70
    %v160 = vunpack.c.l.b16 %v71
    %v161 = vunpack.c.h.b16 %v71
    %v162 = vunpack.c.l.b16 %v72
    %v163 = vunpack.c.h.b16 %v72
    %v164 = vunpack.c.l.b16 %v73
    %v165 = vunpack.c.h.b16 %v73
    %v166 = vunpack.c.l.b16 %v74
    %v167 = vunpack.c.h.b16 %v74
    %v168 = vunpack.c.l.b16 %v75
    %v169 = vunpack.c.h.b16 %v75
    %v170 = vunpack.c.l.b16 %v76
    %v171 = vunpack.c.h.b16 %v76
    %v172 = vunpack.c.l.b16 %v77
    %v173 = vunpack.c.h.b16 %v77
    %v174 = vpack.c.b16 %v112, %v110
    %v175 = vpack.c.b16 %v113, %v111
    %v176 = vpack.c.b16 %v116, %v114
    %v177 = vpack.c.b16 %v117, %v115
    %v178 = vpack.c.b16 %v120, %v118
    %v179 = vpack.c.b16 %v121, %v119
    %v180 = vpack.c.b16 %v124, %v122
    %v181 = vpack.c.b16 %v125, %v123
    %v182 = vpack.c.b16 %v128, %v126
    %v183 = vpack.c.b16 %v129, %v127
    %v184 = vpack.c.b16 %v132, %v130
    %v185 = vpack.c.b16 %v133, %v131
    %v186 = vpack.c.b16 %v136, %v134
    %v187 = vpack.c.b16 %v137, %v135
    %v188 = vpack.c.b16 %v140, %v138
    %v189 = vpack.c.b16 %v141, %v139
    %v190 = vpack.c.b16 %v144, %v142
    %v191 = vpack.c.b16 %v145, %v143
    %v192 = vpack.c.b16 %v148, %v146
    %v193 = vpack.c.b16 %v149, %v147
    %v194 = vpack.c.b16 %v152, %v150
    %v195 = vpack.c.b16 %v153, %v151
    %v196 = vpack.c.b16 %v156, %v154
    %v197 = vpack.c.b16 %v157, %v155
    %v198 = vpack.c.b16 %v160, %v158
    %v199 = vpack.c.b16 %v161, %v159
    %v200 = vpack.c.b16 %v164, %v162
    %v201 = vpack.c.b16 %v165, %v163
    %v202 = vpack.c.b16 %v168, %v166
    %v203 = vpack.c.b16 %v169, %v167
    %v204 = vpack.c.b16 %v172, %v170
    %v205 = vpack.c.b16 %v173, %v171
    %238 = vmatprep.subr.bf16.mxu0 %v189
    %239 = vmatpush1.bf16.msra.mxu0 %v188
    %240 = vmatprep.subr.bf16.mxu0 %v187
    %241 = vmatpush1.bf16.msra.mxu0 %v186
    %242 = vmatprep.subr.bf16.mxu0 %v185
    %243 = vmatpush1.bf16.msra.mxu0 %v184
    %244 = vmatprep.subr.bf16.mxu0 %v183
    %245 = vmatpush1.bf16.msra.mxu0 %v182
    %246 = vmatprep.subr.bf16.mxu0 %v181
    %247 = vmatpush1.bf16.msra.mxu0 %v180
    %248 = vmatprep.subr.bf16.mxu0 %v179
    %249 = vmatpush1.bf16.msra.mxu0 %v178
    %250 = vmatprep.subr.bf16.mxu0 %v177
    %251 = vmatpush1.bf16.msra.mxu0 %v176
    %252 = vmatprep.subr.bf16.mxu0 %v175
    %253 = vmatpush1.bf16.msra.mxu0 %v174
    %254 = vmatprep.subr.bf16.mxu0 %v205
    %255 = vmatpush2.bf16.msra.mxu0 %v204
    %256 = vmatprep.subr.bf16.mxu0 %v203
    %257 = vmatpush2.bf16.msra.mxu0 %v202
    %258 = vmatprep.subr.bf16.mxu0 %v201
    %259 = vmatpush2.bf16.msra.mxu0 %v200
    %260 = vmatprep.subr.bf16.mxu0 %v199
    %261 = vmatpush2.bf16.msra.mxu0 %v198
    %262 = vmatprep.subr.bf16.mxu0 %v197
    %263 = vmatpush2.bf16.msra.mxu0 %v196
    %264 = vmatprep.subr.bf16.mxu0 %v195
    %265 = vmatpush2.bf16.msra.mxu0 %v194
    %266 = vmatprep.subr.bf16.mxu0 %v193
    %267 = vmatpush2.bf16.msra.mxu0 %v192
    %268 = vmatprep.subr.bf16.mxu0 %v191
    %269 = vmatpush2.bf16.msra.mxu0 %v190
    %270 = vmatprep.mubr.bf16.mxu0 %v45
    %271 = vmatmul.mubr.bf16.gmra.mxu0 %v44
    %v272 = vpop.f32.mrf.mxu0
    %v273 = vadd.f32 0.0, %v272
    %v274 = vpop.f32.mrf.mxu0
    %v275 = vadd.f32 0.0, %v274
    %v276 = vpop.f32.mrf.mxu0
    %v277 = vadd.f32 0.0, %v276
    %v278 = vpop.f32.mrf.mxu0
    %v279 = vadd.f32 0.0, %v278
    %280 = vdwg.mxu0
    %281 = vst [vmem:[#allocation7] sm:$0xff] %v273
    %282 = vst [vmem:[#allocation7 + $0x8] sm:$0xff] %v275
    %283 = vst [vmem:[#allocation7 + $0x10] sm:$0xff] %v277
    %284 = vst [vmem:[#allocation7 + $0x18] sm:$0xff] %v279
    // Predicated region
    $region18: #{tpu_custom_call.1} parent=1 // pred_check
      _
    $region19: #{tpu_custom_call.1} parent=1 // pred_check_branch
      %286 = sbr.rel (0) target = $region21
    $region20: #{tpu_custom_call.1} parent=1 // pred_region
      %s288 = ssub.s32 512, 512
      %289 = vsyncadd [#allocation4], %s288
      %s290 = sshll.u32 [#allocation7], 4
      %s291 = int_to_ptr.vmem [resolvable:$true] %s290
      %296 = dma.vmem_to_hbm [thread:$0]  %s291, 512, %s2, [#allocation4], 256, 256, 16
    $region21: #{tpu_custom_call.1} parent=1 // pred_fallthru
      _
    // Predicated region
    $region22: #{tpu_custom_call.1} parent=1 // pred_check
      _
    $region23: #{tpu_custom_call.1} parent=1 // pred_check_branch
      %298 = sbr.rel (0) target = $region25
    $region24: #{tpu_custom_call.1} parent=1 // pred_region
      %299 = dma.done [#allocation4], 512
    $region25: #{tpu_custom_call.1} parent=1 // pred_fallthru
      _
    %300 = vsyncpa [#allocation3], 1
    %301 = vsyncpa [#allocation6], 1
    %302 = vsyncpa [#allocation4], 1

</llo_original>
